<compile_context>
chip_gen: v7x
topology: tpu7x:2x2x1
jax: 0.10.0
libtpu: 0.0.40
codegen_flags: <defaults>
</compile_context>

<pallas_src>
import functools

import jax
import jax.numpy as jnp
from jax.experimental import pallas as pl
from jax.experimental.pallas import tpu as pltpu

_LANES = 128
_MAX_TILE_ROWS = 512  # (512, 128) f32 tile = 256 KiB per input


def _bce_sum_kernel(p_ref, t_ref, out_ref, *, inv_b):
    """Accumulate sum of per-element BCE over the grid; scale by 1/B at the end."""
    step = pl.program_id(0)

    @pl.when(step == 0)
    def _init():
        out_ref[...] = jnp.zeros_like(out_ref)

    p = p_ref[...]  # (tile_rows, 128) f32, lane-dense
    t = t_ref[...]  # (tile_rows, 128) f32
    # PyTorch binary_cross_entropy clamps each log term at -100 and supports
    # soft targets, so keep the two-term form.
    log_p = jnp.maximum(jnp.log(p), -100.0)
    log_1mp = jnp.maximum(jnp.log(1.0 - p), -100.0)
    per_elem = -(t * log_p + (1.0 - t) * log_1mp)
    out_ref[...] += jnp.sum(per_elem, axis=(0, 1), keepdims=True)

    @pl.when(step == pl.num_programs(0) - 1)
    def _finalize():
        out_ref[...] = out_ref[...] * inv_b


def place_model_loss(pred, target):
    """pred: (B, N, 1) probabilities, target: (B, 1) labels -> scalar mean-BCE loss."""
    B = pred.shape[0]

    # Slice the needed column BEFORE the kernel; cast only the B-vector.
    p_sel = pred[:, 0, 0].astype(jnp.float32)         # (B,)
    t_flat = target.reshape(-1).astype(jnp.float32)   # (B,)

    # Lane-dense layout: rows of 128 lanes; rows padded to a multiple of the
    # tile height (itself a multiple of 8 sublanes, capped at _MAX_TILE_ROWS).
    rows = pl.cdiv(B, _LANES)
    tile_rows = min(_MAX_TILE_ROWS, ((rows + 7) // 8) * 8)
    num_tiles = pl.cdiv(rows, tile_rows)
    rows_pad = num_tiles * tile_rows
    pad = rows_pad * _LANES - B

    # Pad with (p=1, t=1): clamped BCE is exactly 0 there, so padding adds
    # nothing to the sum; the final scale uses the true B, not the padded B.
    p2d = jnp.pad(p_sel, (0, pad), constant_values=1.0).reshape(rows_pad, _LANES)
    t2d = jnp.pad(t_flat, (0, pad), constant_values=1.0).reshape(rows_pad, _LANES)

    kernel = functools.partial(_bce_sum_kernel, inv_b=1.0 / B)

    out = pl.pallas_call(
        kernel,
        out_shape=jax.ShapeDtypeStruct((1, 1), jnp.float32),
        grid=(num_tiles,),
        in_specs=[
            pl.BlockSpec((tile_rows, _LANES), lambda i: (i, 0)),
            pl.BlockSpec((tile_rows, _LANES), lambda i: (i, 0)),
        ],
        # Constant index_map -> output block stays VMEM-resident across the
        # grid (running-sum accumulator), finalized with 1/B on the last step.
        out_specs=pl.BlockSpec((1, 1), lambda i: (0, 0)),
        compiler_params=pltpu.CompilerParams(
            dimension_semantics=("arbitrary",),
        ),
    )(p2d, t2d)
    return out[0, 0]


def _ref_loss(pred, target):
    """Pure-JAX reference (same math as F.binary_cross_entropy, mean)."""
    p = pred[:, 0, 0].astype(jnp.float32)
    t = target.reshape(-1).astype(jnp.float32)
    return jnp.mean(-(t * jnp.maximum(jnp.log(p), -100.0)
                      + (1.0 - t) * jnp.maximum(jnp.log(1.0 - p), -100.0)))


if __name__ == "__main__":
    key = jax.random.PRNGKey(0)
    k_pred, k_tgt = jax.random.split(key)

    # Shapes implied by the module: pred (B, N, 1), target (B, 1).
    B, N = 2, 8
    pred = jax.nn.sigmoid(jax.random.normal(k_pred, (B, N, 1), dtype=jnp.float32))
    target = (jax.random.uniform(k_tgt, (B, 1)) > 0.5).astype(jnp.float32)

    loss = jax.block_until_ready(place_model_loss(pred, target))
    assert jnp.allclose(loss, _ref_loss(pred, target), atol=1e-6, rtol=1e-5), loss

    # Second check: batch that is not a lane multiple (exercises the padding path).
    k3, k4 = jax.random.split(k_tgt)
    B2, N2 = 300, 4
    pred2 = jax.nn.sigmoid(jax.random.normal(k3, (B2, N2, 1), dtype=jnp.float32))
    target2 = (jax.random.uniform(k4, (B2, 1)) > 0.5).astype(jnp.float32)
    loss2 = jax.block_until_ready(place_model_loss(pred2, target2))
    assert jnp.allclose(loss2, _ref_loss(pred2, target2), atol=1e-6, rtol=1e-5), loss2

    print("KERNEL_OK")
</pallas_src>

<mosaic_0001>
module attributes {stable_mosaic.version = 11 : i64} {
  func.func @_bce_sum_kernel(%arg0: i32, %arg1: memref<8x128xf32, #tpu.memory_space<vmem>>, %arg2: memref<8x128xf32, #tpu.memory_space<vmem>>, %arg3: memref<1x1xf32, #tpu.memory_space<vmem>>) attributes {dimension_semantics = [#tpu.dimension_semantics<arbitrary>], iteration_bounds = array<i64: 1>, scalar_prefetch = 0 : i64, scratch_operands = 0 : i64, tpu.core_type = #tpu.core_type<tc>, window_params = [{transform_indices = @transform_0, window_bounds = array<i64: 8, 128>}, {transform_indices = @transform_1, window_bounds = array<i64: 8, 128>}, {pipeline_mode = #tpu.pipeline_mode<synchronous>, transform_indices = @transform_2, window_bounds = array<i64: 1, 1>}]} {
    %c0_i32 = arith.constant 0 : i32
    %0 = arith.cmpi eq, %arg0, %c0_i32 : i32
    %1 = arith.extui %0 : i1 to i32
    %c0_i32_0 = arith.constant 0 : i32
    %2 = arith.cmpi ne, %1, %c0_i32_0 : i32
    scf.if %2 {
      %cst_15 = arith.constant 0.000000e+00 : f32
      %31 = vector.broadcast %cst_15 : f32 to vector<1x1xf32>
      %c0_16 = arith.constant 0 : index
      %c0_17 = arith.constant 0 : index
      %32 = vector.load %arg3[%c0_16, %c0_17] : memref<1x1xf32, #tpu.memory_space<vmem>>, vector<1x1xf32>
      tpu.vector_store %arg3[%c0_16, %c0_17], %31 {strides = array<i32>} : memref<1x1xf32, #tpu.memory_space<vmem>>, vector<1x1xf32>,
    } else {
    }
    %c0 = arith.constant 0 : index
    %c0_1 = arith.constant 0 : index
    %3 = vector.load %arg1[%c0, %c0_1] : memref<8x128xf32, #tpu.memory_space<vmem>>, vector<8x128xf32>
    %c0_2 = arith.constant 0 : index
    %c0_3 = arith.constant 0 : index
    %4 = vector.load %arg2[%c0_2, %c0_3] : memref<8x128xf32, #tpu.memory_space<vmem>>, vector<8x128xf32>
    %5 = math.log %3 : vector<8x128xf32>
    %cst = arith.constant -1.000000e+02 : f32
    %6 = vector.broadcast %cst : f32 to vector<8x128xf32>
    %7 = arith.maximumf %5, %6 : vector<8x128xf32>
    %cst_4 = arith.constant 1.000000e+00 : f32
    %8 = vector.broadcast %cst_4 : f32 to vector<8x128xf32>
    %9 = arith.subf %8, %3 : vector<8x128xf32>
    %10 = math.log %9 : vector<8x128xf32>
    %cst_5 = arith.constant -1.000000e+02 : f32
    %11 = vector.broadcast %cst_5 : f32 to vector<8x128xf32>
    %12 = arith.maximumf %10, %11 : vector<8x128xf32>
    %13 = arith.mulf %4, %7 : vector<8x128xf32>
    %cst_6 = arith.constant 1.000000e+00 : f32
    %14 = vector.broadcast %cst_6 : f32 to vector<8x128xf32>
    %15 = arith.subf %14, %4 : vector<8x128xf32>
    %16 = arith.mulf %15, %12 : vector<8x128xf32>
    %17 = arith.addf %13, %16 : vector<8x128xf32>
    %cst_7 = arith.constant 0.000000e+00 : f32
    %18 = vector.broadcast %cst_7 : f32 to vector<8x128xf32>
    %19 = arith.subf %18, %17 : vector<8x128xf32>
    %c0_8 = arith.constant 0 : index
    %c0_9 = arith.constant 0 : index
    %20 = vector.load %arg3[%c0_8, %c0_9] : memref<1x1xf32, #tpu.memory_space<vmem>>, vector<1x1xf32>
    %21 = vector.shape_cast %19 : vector<8x128xf32> to vector<1x8x128xf32>
    %cst_10 = arith.constant dense<0.000000e+00> : vector<1xf32>
    %22 = vector.multi_reduction <add>, %21, %cst_10 [1, 2] : vector<1x8x128xf32> to vector<1xf32>
    %23 = vector.shape_cast %22 : vector<1xf32> to vector<1x1x1xf32>
    %24 = vector.extract %23[0, 0, 0] : f32 from vector<1x1x1xf32>
    %25 = vector.broadcast %24 : f32 to vector<1x1xf32>
    %26 = arith.addf %20, %25 : vector<1x1xf32>
    %c0_11 = arith.constant 0 : index
    %c0_12 = arith.constant 0 : index
    %27 = vector.load %arg3[%c0_11, %c0_12] : memref<1x1xf32, #tpu.memory_space<vmem>>, vector<1x1xf32>
    tpu.vector_store %arg3[%c0_11, %c0_12], %26 {strides = array<i32>} : memref<1x1xf32, #tpu.memory_space<vmem>>, vector<1x1xf32>,
    %c0_i32_13 = arith.constant 0 : i32
    %28 = arith.cmpi eq, %arg0, %c0_i32_13 : i32
    %29 = arith.extui %28 : i1 to i32
    %c0_i32_14 = arith.constant 0 : i32
    %30 = arith.cmpi ne, %29, %c0_i32_14 : i32
    scf.if %30 {
      %c0_15 = arith.constant 0 : index
      %c0_16 = arith.constant 0 : index
      %31 = vector.load %arg3[%c0_15, %c0_16] : memref<1x1xf32, #tpu.memory_space<vmem>>, vector<1x1xf32>
      %cst_17 = arith.constant 5.000000e-01 : f32
      %32 = vector.broadcast %cst_17 : f32 to vector<1x1xf32>
      %33 = arith.mulf %31, %32 : vector<1x1xf32>
      %c0_18 = arith.constant 0 : index
      %c0_19 = arith.constant 0 : index
      %34 = vector.load %arg3[%c0_18, %c0_19] : memref<1x1xf32, #tpu.memory_space<vmem>>, vector<1x1xf32>
      tpu.vector_store %arg3[%c0_18, %c0_19], %33 {strides = array<i32>} : memref<1x1xf32, #tpu.memory_space<vmem>>, vector<1x1xf32>,
    } else {
    }
    return
  }
  func.func @transform_0(%arg0: i32) -> (i32, i32) {
    %c0_i32 = arith.constant 0 : i32
    %c0_i32_0 = arith.constant 0 : i32
    return %arg0, %c0_i32 : i32, i32
  }
  func.func @transform_1(%arg0: i32) -> (i32, i32) {
    %c0_i32 = arith.constant 0 : i32
    %c0_i32_0 = arith.constant 0 : i32
    return %arg0, %c0_i32 : i32, i32
  }
  func.func @transform_2(%arg0: i32) -> (i32, i32) {
    %c0_i32 = arith.constant 0 : i32
    %c0_i32_0 = arith.constant 0 : i32
    %c0_i32_1 = arith.constant 0 : i32
    return %c0_i32, %c0_i32_0 : i32, i32
  }
}

</mosaic_0001>

<llo_original>
// kernel: tpu_custom_call.1
$region0: #{tpu_custom_call.1}
  #allocation0 [shape = 'u32[]', space=smem, size = 0x4, offset = 0x4, fixed_abs, tag = 'smem constant byte address 0x4 - core index']
  #allocation1 [shape = 'u32[144,128]{1,0:T(1,128)}', space=vmem, size = 0x12000, scoped, tag = 'internal scratch']
  %s0 = inlined_call_operand.hbm [shape: f32[8,128], index: 0, kind: input, shape index: {}]
  %s1 = inlined_call_operand.hbm [shape: f32[8,128], index: 1, kind: input, shape index: {}]
  %s2 = inlined_call_operand.hbm [shape: f32[1,1], index: 2, kind: output, shape index: {}]
  %s3 = sld [smem:[#allocation0]]
  $region34: #{tpu_custom_call.1} parent=0
    _
  %s5 = ssub.s32 1, %s3
  %s6 = scalar_select 0, %s5, %s3
  $region1: #{tpu_custom_call.1} parent=0
    #allocation2 [shape = 'u8[4096]{0}', space=vmem, size = 0x1000, scoped, tag = 'input window, operand 0, single buffered']
    #allocation3 [shape = 's32[1]{0}', space=sflag, size = 0x4, scoped, tag = 'scoped memory for tpu_custom_call.1']
    #allocation4 [shape = 's32[1]{0}', space=sflag, size = 0x4, scoped, tag = 'scoped memory for tpu_custom_call.1']
    #allocation5 [shape = 'u8[4096]{0}', space=vmem, size = 0x1000, scoped, tag = 'input window, operand 1, single buffered']
    #allocation6 [shape = 's32[1]{0}', space=sflag, size = 0x4, scoped, tag = 'scoped memory for tpu_custom_call.1']
    #allocation7 [shape = 'u8[512]{0}', space=vmem, size = 0x400, scoped, tag = 'output window, operand 0, single buffered']
    %7 = vsyncpa [#allocation3], 0
    %8 = vsyncpa [#allocation6], 0
    %9 = vsyncpa [#allocation4], 0
    // Predicated region
    $region2: #{tpu_custom_call.1} parent=1 // pred_check
      _
    $region3: #{tpu_custom_call.1} parent=1 // pred_check_branch
      %11 = sbr.rel (0) target = $region5
    $region4: #{tpu_custom_call.1} parent=1 // pred_region
      %s13 = ssub.s32 128, 128
      %14 = vsyncadd [#allocation3], %s13
      %s16 = sshll.u32 [#allocation2], 4
      %s17 = int_to_ptr.vmem [resolvable:$true] %s16
      %19 = dma.hbm_to_vmem [thread:$0]  %s0, 128, %s17, [#allocation3]
    $region5: #{tpu_custom_call.1} parent=1 // pred_fallthru
      _
    // Predicated region
    $region6: #{tpu_custom_call.1} parent=1 // pred_check
      _
    $region7: #{tpu_custom_call.1} parent=1 // pred_check_branch
      %21 = sbr.rel (0) target = $region9
    $region8: #{tpu_custom_call.1} parent=1 // pred_region
      %s23 = ssub.s32 128, 128
      %24 = vsyncadd [#allocation6], %s23
      %s26 = sshll.u32 [#allocation5], 4
      %s27 = int_to_ptr.vmem [resolvable:$true] %s26
      %29 = dma.hbm_to_vmem [thread:$0]  %s1, 128, %s27, [#allocation6]
    $region9: #{tpu_custom_call.1} parent=1 // pred_fallthru
      _
    // Predicated region
    $region10: #{tpu_custom_call.1} parent=1 // pred_check
      _
    $region11: #{tpu_custom_call.1} parent=1 // pred_check_branch
      %31 = sbr.rel (0) target = $region13
    $region12: #{tpu_custom_call.1} parent=1 // pred_region
      %32 = dma.done [#allocation3], 128
    $region13: #{tpu_custom_call.1} parent=1 // pred_fallthru
      _
    // Predicated region
    $region14: #{tpu_custom_call.1} parent=1 // pred_check
      _
    $region15: #{tpu_custom_call.1} parent=1 // pred_check_branch
      %34 = sbr.rel (0) target = $region17
    $region16: #{tpu_custom_call.1} parent=1 // pred_region
      %35 = dma.done [#allocation6], 128
    $region17: #{tpu_custom_call.1} parent=1 // pred_fallthru
      _
    %p36 = scmp.eq.s32.totalorder 0, 0
    // Predicated region
    $region18: #{tpu_custom_call.1} parent=1 // pred_check
      %p37 = pneg %p36
    $region19: #{tpu_custom_call.1} parent=1 // pred_check_branch
      %39 = sbr.rel (%p37) target = $region21
    $region20: #{tpu_custom_call.1} parent=1 // pred_region
      %vm40 = vcmask 0
      %41 = vst.msk [vmem:[#allocation7] sm:$0x1] %vm40, 0.0
    $region21: #{tpu_custom_call.1} parent=1 // pred_fallthru
      _
    %v42 = vld [vmem:[#allocation2] sm:$0xff]
    %v43 = vld [vmem:[#allocation5] sm:$0xff]
    %v44 = vlog2.pop %v42
    %v45 = vmul.f32 %v44, 0.6931472
    %v46 = vmax.f32 %v45, -100.0
    %v47 = vsub.f32 1.0, %v42
    %v48 = vlog2.pop %v47
    %v49 = vmul.f32 %v48, 0.6931472
    %v50 = vmax.f32 %v49, -100.0
    %v51 = vmul.f32 %v43, %v46
    %v52 = vsub.f32 1.0, %v43
    %v53 = vmul.f32 %v52, %v50
    %v54 = vadd.f32 %v51, %v53
    %v55 = vsub.f32 0.0, %v54
    %v56 = vld [vmem:[#allocation7] sm:$0x1]
    %57 = vadd.xlane.f32.xlu0 %v55
    %v58 = vpop.xlane.xlu0 %57
    %v59 = vrot.slane %v58, 4
    %v60 = vadd.f32 %v58, %v59
    %v61 = vrot.slane %v60, 2
    %v62 = vadd.f32 %v60, %v61
    %v63 = vrot.slane %v62, 1
    %v64 = vadd.f32 %v62, %v63
    %s65 = vtos %v64
    %v66 = vstv %s65
    %v67 = vadd.f32 %v56, %v66
    %vm68 = vcmask 0
    %69 = vst.msk [vmem:[#allocation7] sm:$0x1] %vm68, %v67
    // Predicated region
    $region22: #{tpu_custom_call.1} parent=1 // pred_check
      %p70 = pneg %p36
    $region23: #{tpu_custom_call.1} parent=1 // pred_check_branch
      %72 = sbr.rel (%p70) target = $region25
    $region24: #{tpu_custom_call.1} parent=1 // pred_region
      %v73 = vld [vmem:[#allocation7] sm:$0x1]
      %v74 = vmul.f32 %v73, 0.5
      %75 = vst.msk [vmem:[#allocation7] sm:$0x1] %vm68, %v74
    $region25: #{tpu_custom_call.1} parent=1 // pred_fallthru
      _
    // Predicated region
    $region26: #{tpu_custom_call.1} parent=1 // pred_check
      _
    $region27: #{tpu_custom_call.1} parent=1 // pred_check_branch
      %77 = sbr.rel (0) target = $region29
    $region28: #{tpu_custom_call.1} parent=1 // pred_region
      %s79 = ssub.s32 16, 16
      %80 = vsyncadd [#allocation4], %s79
      %s82 = sshll.u32 [#allocation7], 4
      %s83 = int_to_ptr.vmem [resolvable:$true] %s82
      %85 = dma.vmem_to_hbm [thread:$0]  %s83, 16, %s2, [#allocation4]
    $region29: #{tpu_custom_call.1} parent=1 // pred_fallthru
      _
    // Predicated region
    $region30: #{tpu_custom_call.1} parent=1 // pred_check
      _
    $region31: #{tpu_custom_call.1} parent=1 // pred_check_branch
      %87 = sbr.rel (0) target = $region33
    $region32: #{tpu_custom_call.1} parent=1 // pred_region
      %88 = dma.done [#allocation4], 16
    $region33: #{tpu_custom_call.1} parent=1 // pred_fallthru
      _
    %89 = vsyncpa [#allocation3], 1
    %90 = vsyncpa [#allocation6], 1
    %91 = vsyncpa [#allocation4], 1

</llo_original>
